<compile_context>
chip_gen: v5e
topology: v5e:2x2
jax: 0.10.0
libtpu: 0.0.40
codegen_flags: <defaults>
</compile_context>

<pallas_src>
import functools

import jax
import jax.numpy as jnp
from jax import lax
from jax.experimental import pallas as pl
from jax.experimental.pallas import tpu as pltpu


def _round_up(n, m):
    return ((n + m - 1) // m) * m


def _mix32(x):
    """SplitMix32/murmur3-style finalizer: structured uint32 counters -> uniform bits."""
    x = x ^ (x >> 16)
    x = x * jnp.uint32(0x7FEB352D)
    x = x ^ (x >> 15)
    x = x * jnp.uint32(0x846CA68B)
    x = x ^ (x >> 16)
    return x


def mlp_kernel(x_ref, w1_ref, b1_ref, w2_ref, b2_ref, w3_ref, b3_ref, seed_ref,
               o_ref, *, dropout_rate, training, batch_tile):
    """Batch-on-lane fused MLP. Activations are [features, TM] tiles (TM = batch tile)."""
    apply_dropout = training and dropout_rate > 0.0

    if apply_dropout:
        # Integer-threshold inverted dropout: keep iff bits >= p * 2^32  (P[keep] = 1-p).
        drop_thresh = jnp.uint32(min(int(dropout_rate * (1 << 32)), (1 << 32) - 1))
        keep_scale = jnp.float32(1.0 / (1.0 - dropout_rate))
        seed_u = seed_ref[0].astype(jnp.uint32)
        col_off = pl.program_id(0) * batch_tile          # global batch offset of this tile

        def relu_dropout(pre, layer_salt):
            shape = pre.shape
            rows = lax.broadcasted_iota(jnp.int32, shape, 0).astype(jnp.uint32)
            cols = (lax.broadcasted_iota(jnp.int32, shape, 1) + col_off).astype(jnp.uint32)
            bits = _mix32((rows * jnp.uint32(0x9E3779B1))
                          ^ (cols * jnp.uint32(0x85EBCA77))
                          ^ seed_u ^ jnp.uint32(layer_salt))
            # Fused ReLU + dropout: single select over the pre-activation.
            keep = (bits >= drop_thresh) & (pre > 0.0)
            return jnp.where(keep, pre * keep_scale, 0.0)
    else:
        def relu_dropout(pre, layer_salt):
            return jnp.maximum(pre, 0.0)

    x = x_ref[...]                                       # [TM, F_in] (batch-major in HBM)
    w_dtype = w1_ref.dtype

    # layer_input: contract on F_in -> [f1_out, TM]; operand transpose happens on-chip.
    h = lax.dot_general(w1_ref[...], x.astype(w_dtype),
                        dimension_numbers=(((1,), (1,)), ((), ())),
                        preferred_element_type=jnp.float32) + b1_ref[...]
    h = relu_dropout(h, 0x243F6A88)

    # layer_hidden: W2 @ h -> [f2_out, TM]
    h = jnp.dot(w2_ref[...], h.astype(w_dtype),
                preferred_element_type=jnp.float32) + b2_ref[...]
    h = relu_dropout(h, 0x13198A2E)

    # layer_output: W3 @ h + b3 (no activation), lane-dense [out_dim, TM] store.
    out = jnp.dot(w3_ref[...], h.astype(w_dtype),
                  preferred_element_type=jnp.float32) + b3_ref[...]
    o_ref[...] = out.astype(o_ref.dtype)


def basic_mlp_forward(x, params, *, dropout_rate=0.5, training=False, seed=0,
                      max_tile=2048, use_bf16_mxu=False):
    """x: [B, F_in]; params: wN in PyTorch [out, in] layout, bN as [out]. Returns [B, out]."""
    B, f_in = x.shape
    f1_out = params["w1"].shape[0]
    f2_out = params["w2"].shape[0]
    out_dim = params["w3"].shape[0]
    if training and dropout_rate > 0.0:
        assert dropout_rate < 1.0, "dropout_rate must be < 1.0 in training mode"

    # ---- batch tiling: batch lives on the lane axis inside the kernel ----
    max_tile = max(128, _round_up(max_tile, 128))
    TM = min(max_tile, _round_up(B, 128))
    if _round_up(B, 128) >= 256:
        # Keep >= 2 balanced grid steps so both v7x TensorCores get work.
        TM = min(TM, _round_up((B + 1) // 2, 128))
    B_pad = _round_up(B, TM)
    n_tiles = B_pad // TM

    mxu_dtype = jnp.bfloat16 if use_bf16_mxu else x.dtype
    x_in = x.astype(mxu_dtype)
    if B_pad != B:
        x_in = jnp.pad(x_in, ((0, B_pad - B), (0, 0)))   # batch-only pad, no transpose

    w1 = params["w1"].astype(mxu_dtype)
    w2 = params["w2"].astype(mxu_dtype)
    w3 = params["w3"].astype(mxu_dtype)
    # Biases as f32 [out, 1] columns so they broadcast over the (lane-axis) batch.
    b1 = params["b1"].astype(jnp.float32).reshape(-1, 1)
    b2 = params["b2"].astype(jnp.float32).reshape(-1, 1)
    b3 = params["b3"].astype(jnp.float32).reshape(-1, 1)
    seed_arr = jnp.array([seed], dtype=jnp.int32)

    kernel = functools.partial(mlp_kernel, dropout_rate=float(dropout_rate),
                               training=bool(training), batch_tile=TM)

    def resident(shape):
        # Constant block index across the grid -> DMA'd once, stays resident in VMEM.
        return pl.BlockSpec(shape, lambda i: (0, 0))

    flops = 2 * B_pad * (f_in * f1_out + f1_out * f2_out + f2_out * out_dim)
    bytes_accessed = int(x_in.size * x_in.dtype.itemsize
                         + out_dim * B_pad * x.dtype.itemsize
                         + sum(int(w.size) * w.dtype.itemsize for w in (w1, w2, w3))
                         + sum(int(b.size) * 4 for b in (b1, b2, b3)))

    out_t = pl.pallas_call(
        kernel,
        out_shape=jax.ShapeDtypeStruct((out_dim, B_pad), x.dtype),
        grid_spec=pltpu.PrefetchScalarGridSpec(
            num_scalar_prefetch=0,
            grid=(n_tiles,),
            in_specs=[
                pl.BlockSpec((TM, f_in), lambda i: (i, 0)),        # x tile, batch-major
                resident(w1.shape), resident(b1.shape),
                resident(w2.shape), resident(b2.shape),
                resident(w3.shape), resident(b3.shape),
                pl.BlockSpec(memory_space=pltpu.MemorySpace.SMEM), # seed scalar
            ],
            out_specs=pl.BlockSpec((out_dim, TM), lambda i: (0, i)),
        ),
        compiler_params=pltpu.CompilerParams(
            dimension_semantics=("parallel",)),                    # megacore shard on v7x
        cost_estimate=pl.CostEstimate(flops=flops, transcendentals=0,
                                      bytes_accessed=bytes_accessed),
    )(x_in, w1, b1, w2, b2, w3, b3, seed_arr)

    # Module semantics: [B, out_dim].  (In-kernel output stays lane-dense; callers that
    # can consume [out_dim, B] may skip this transpose.)
    return out_t[:, :B].T


def init_params(key, input_sizes, output_sizes, dtype=jnp.float32):
    """Deterministic init matching BasicMLPModel's Linear layers (PyTorch [out, in] layout)."""
    params = {}
    for idx, (fin, fout) in enumerate(zip(input_sizes, output_sizes), start=1):
        key, kw, kb = jax.random.split(key, 3)
        bound = 1.0 / (fin ** 0.5)  # PyTorch's default uniform bound
        params[f"w{idx}"] = jax.random.uniform(kw, (fout, fin), dtype,
                                               minval=-bound, maxval=bound)
        params[f"b{idx}"] = jax.random.uniform(kb, (fout,), dtype,
                                               minval=-bound, maxval=bound)
    return params


def reference_forward(x, params):
    h = jnp.maximum(x @ params["w1"].T + params["b1"], 0.0)
    h = jnp.maximum(h @ params["w2"].T + params["b2"], 0.0)
    return h @ params["w3"].T + params["b3"]


if __name__ == "__main__":
    # Module config: layer_input 32->64, layer_hidden 64->64, layer_output 64->16
    input_sizes = (32, 64, 64)
    output_sizes = (64, 64, 16)
    dropout_rate = 0.5
    batch = 8

    key = jax.random.PRNGKey(0)
    key, kx = jax.random.split(key)
    x = jax.random.normal(kx, (batch, input_sizes[0]), jnp.float32)
    params = init_params(key, input_sizes, output_sizes)

    # Eval-mode forward (dropout is identity) — checked against a pure-JAX reference.
    out = basic_mlp_forward(x, params, dropout_rate=dropout_rate, training=False)
    out = jax.block_until_ready(out)
    ref = reference_forward(x, params)
    assert out.shape == (batch, output_sizes[2])
    assert jnp.allclose(out, ref, atol=1e-5, rtol=1e-5)

    # Training-mode forward exercises the in-kernel hash-based inverted dropout.
    out_tr = basic_mlp_forward(x, params, dropout_rate=dropout_rate,
                               training=True, seed=123)
    out_tr = jax.block_until_ready(out_tr)
    assert out_tr.shape == (batch, output_sizes[2])
    assert bool(jnp.all(jnp.isfinite(out_tr)))

    print("KERNEL_OK")
</pallas_src>

<mosaic_0001>
module attributes {stable_mosaic.version = 11 : i64} {
  func.func @mlp_kernel(%arg0: i32, %arg1: memref<128x32xf32, #tpu.memory_space<vmem>>, %arg2: memref<64x32xf32, #tpu.memory_space<vmem>>, %arg3: memref<64x1xf32, #tpu.memory_space<vmem>>, %arg4: memref<64x64xf32, #tpu.memory_space<vmem>>, %arg5: memref<64x1xf32, #tpu.memory_space<vmem>>, %arg6: memref<16x64xf32, #tpu.memory_space<vmem>>, %arg7: memref<16x1xf32, #tpu.memory_space<vmem>>, %arg8: memref<1xi32, #tpu.memory_space<smem>>, %arg9: memref<16x128xf32, #tpu.memory_space<vmem>>) attributes {dimension_semantics = [#tpu.dimension_semantics<parallel>], iteration_bounds = array<i64: 1>, scalar_prefetch = 0 : i64, scratch_operands = 0 : i64, tpu.core_type = #tpu.core_type<tc>, window_params = [{transform_indices = @transform_0, window_bounds = array<i64: 128, 32>}, {pipeline_mode = #tpu.pipeline_mode<synchronous>, transform_indices = @transform_1, window_bounds = array<i64: 64, 32>}, {pipeline_mode = #tpu.pipeline_mode<synchronous>, transform_indices = @transform_2, window_bounds = array<i64: 64, 1>}, {pipeline_mode = #tpu.pipeline_mode<synchronous>, transform_indices = @transform_3, window_bounds = array<i64: 64, 64>}, {pipeline_mode = #tpu.pipeline_mode<synchronous>, transform_indices = @transform_4, window_bounds = array<i64: 64, 1>}, {pipeline_mode = #tpu.pipeline_mode<synchronous>, transform_indices = @transform_5, window_bounds = array<i64: 16, 64>}, {pipeline_mode = #tpu.pipeline_mode<synchronous>, transform_indices = @transform_6, window_bounds = array<i64: 16, 1>}, {transform_indices = @transform_7, window_bounds = array<i64: 1>}, {transform_indices = @transform_8, window_bounds = array<i64: 16, 128>}]} {
    %c0 = arith.constant 0 : index
    %c0_0 = arith.constant 0 : index
    %0 = vector.load %arg1[%c0, %c0_0] : memref<128x32xf32, #tpu.memory_space<vmem>>, vector<128x32xf32>
    %c0_1 = arith.constant 0 : index
    %c0_2 = arith.constant 0 : index
    %1 = vector.load %arg2[%c0_1, %c0_2] : memref<64x32xf32, #tpu.memory_space<vmem>>, vector<64x32xf32>
    %cst = arith.constant dense<0.000000e+00> : vector<64x128xf32>
    %2 = tpu.matmul %1, %0, %cst {dimension_numbers = #tpu.dot_dimension_numbers<[1], [1], [0], [0], [0, 0, 1, 0], [], []>} : vector<64x32xf32>, vector<128x32xf32>, vector<64x128xf32> -> vector<64x128xf32>
    %c0_3 = arith.constant 0 : index
    %c0_4 = arith.constant 0 : index
    %3 = vector.load %arg3[%c0_3, %c0_4] : memref<64x1xf32, #tpu.memory_space<vmem>>, vector<64x1xf32>
    %4 = vector.broadcast %3 : vector<64x1xf32> to vector<64x128xf32>
    %5 = arith.addf %2, %4 : vector<64x128xf32>
    %cst_5 = arith.constant 0.000000e+00 : f32
    %6 = vector.broadcast %cst_5 : f32 to vector<64x128xf32>
    %7 = arith.maximumf %5, %6 : vector<64x128xf32>
    %c0_6 = arith.constant 0 : index
    %c0_7 = arith.constant 0 : index
    %8 = vector.load %arg4[%c0_6, %c0_7] : memref<64x64xf32, #tpu.memory_space<vmem>>, vector<64x64xf32>
    %cst_8 = arith.constant dense<0.000000e+00> : vector<64x128xf32>
    %9 = tpu.matmul %8, %7, %cst_8 {dimension_numbers = #tpu.dot_dimension_numbers<[1], [0], [0], [1], [0, 0, 1, 1], [], []>} : vector<64x64xf32>, vector<64x128xf32>, vector<64x128xf32> -> vector<64x128xf32>
    %c0_9 = arith.constant 0 : index
    %c0_10 = arith.constant 0 : index
    %10 = vector.load %arg5[%c0_9, %c0_10] : memref<64x1xf32, #tpu.memory_space<vmem>>, vector<64x1xf32>
    %11 = vector.broadcast %10 : vector<64x1xf32> to vector<64x128xf32>
    %12 = arith.addf %9, %11 : vector<64x128xf32>
    %cst_11 = arith.constant 0.000000e+00 : f32
    %13 = vector.broadcast %cst_11 : f32 to vector<64x128xf32>
    %14 = arith.maximumf %12, %13 : vector<64x128xf32>
    %c0_12 = arith.constant 0 : index
    %c0_13 = arith.constant 0 : index
    %15 = vector.load %arg6[%c0_12, %c0_13] : memref<16x64xf32, #tpu.memory_space<vmem>>, vector<16x64xf32>
    %cst_14 = arith.constant dense<0.000000e+00> : vector<16x128xf32>
    %16 = tpu.matmul %15, %14, %cst_14 {dimension_numbers = #tpu.dot_dimension_numbers<[1], [0], [0], [1], [0, 0, 1, 1], [], []>} : vector<16x64xf32>, vector<64x128xf32>, vector<16x128xf32> -> vector<16x128xf32>
    %c0_15 = arith.constant 0 : index
    %c0_16 = arith.constant 0 : index
    %17 = vector.load %arg7[%c0_15, %c0_16] : memref<16x1xf32, #tpu.memory_space<vmem>>, vector<16x1xf32>
    %18 = vector.broadcast %17 : vector<16x1xf32> to vector<16x128xf32>
    %19 = arith.addf %16, %18 : vector<16x128xf32>
    %c0_17 = arith.constant 0 : index
    %c0_18 = arith.constant 0 : index
    %20 = vector.load %arg9[%c0_17, %c0_18] : memref<16x128xf32, #tpu.memory_space<vmem>>, vector<16x128xf32>
    tpu.vector_store %arg9[%c0_17, %c0_18], %19 {strides = array<i32>} : memref<16x128xf32, #tpu.memory_space<vmem>>, vector<16x128xf32>,
    return
  }
  func.func @transform_0(%arg0: i32) -> (i32, i32) {
    %c0_i32 = arith.constant 0 : i32
    %c0_i32_0 = arith.constant 0 : i32
    return %arg0, %c0_i32 : i32, i32
  }
  func.func @transform_1(%arg0: i32) -> (i32, i32) {
    %c0_i32 = arith.constant 0 : i32
    %c0_i32_0 = arith.constant 0 : i32
    %c0_i32_1 = arith.constant 0 : i32
    return %c0_i32, %c0_i32_0 : i32, i32
  }
  func.func @transform_2(%arg0: i32) -> (i32, i32) {
    %c0_i32 = arith.constant 0 : i32
    %c0_i32_0 = arith.constant 0 : i32
    %c0_i32_1 = arith.constant 0 : i32
    return %c0_i32, %c0_i32_0 : i32, i32
  }
  func.func @transform_3(%arg0: i32) -> (i32, i32) {
    %c0_i32 = arith.constant 0 : i32
    %c0_i32_0 = arith.constant 0 : i32
    %c0_i32_1 = arith.constant 0 : i32
    return %c0_i32, %c0_i32_0 : i32, i32
  }
  func.func @transform_4(%arg0: i32) -> (i32, i32) {
    %c0_i32 = arith.constant 0 : i32
    %c0_i32_0 = arith.constant 0 : i32
    %c0_i32_1 = arith.constant 0 : i32
    return %c0_i32, %c0_i32_0 : i32, i32
  }
  func.func @transform_5(%arg0: i32) -> (i32, i32) {
    %c0_i32 = arith.constant 0 : i32
    %c0_i32_0 = arith.constant 0 : i32
    %c0_i32_1 = arith.constant 0 : i32
    return %c0_i32, %c0_i32_0 : i32, i32
  }
  func.func @transform_6(%arg0: i32) -> (i32, i32) {
    %c0_i32 = arith.constant 0 : i32
    %c0_i32_0 = arith.constant 0 : i32
    %c0_i32_1 = arith.constant 0 : i32
    return %c0_i32, %c0_i32_0 : i32, i32
  }
  func.func @transform_7(%arg0: i32) -> i32 {
    %c0_i32 = arith.constant 0 : i32
    %c0_i32_0 = arith.constant 0 : i32
    return %c0_i32 : i32
  }
  func.func @transform_8(%arg0: i32) -> (i32, i32) {
    %c0_i32 = arith.constant 0 : i32
    %c0_i32_0 = arith.constant 0 : i32
    return %c0_i32, %arg0 : i32, i32
  }
}

</mosaic_0001>

<llo_original>
// kernel: tpu_custom_call.1
$region0: #{tpu_custom_call.1}
  #allocation0 [shape = 'u32[]', space=smem, size = 0x4, offset = 0x4, fixed_abs, tag = 'smem constant byte address 0x4 - core index']
  #allocation1 [shape = 'u32[72,128]{1,0:T(1,128)}', space=vmem, size = 0x9000, scoped, tag = 'internal scratch']
  #allocation2 [shape = 's32[1]{0:T(128)S(6)}', space=smem, size = 0x200, scoped, tag = 'scoped memory for tpu_custom_call.1']
  %s0 = inlined_call_operand.vmem [shape: f32[128,32], index: 0, kind: input, shape index: {}]
  %s1 = inlined_call_operand.vmem [shape: f32[64,32], index: 1, kind: input, shape index: {}]
  %s2 = inlined_call_operand.vmem [shape: f32[64,1], index: 2, kind: input, shape index: {}]
  %s3 = inlined_call_operand.vmem [shape: f32[64,64], index: 3, kind: input, shape index: {}]
  %s4 = inlined_call_operand.vmem [shape: f32[64,1], index: 4, kind: input, shape index: {}]
  %s5 = inlined_call_operand.vmem [shape: f32[16,64], index: 5, kind: input, shape index: {}]
  %s6 = inlined_call_operand.vmem [shape: f32[16,1], index: 6, kind: input, shape index: {}]
  %s7 = inlined_call_operand.<no memory space> [shape: s32[1], index: 7, kind: input, shape index: {}]
  %s8 = inlined_call_operand.hbm [shape: f32[16,128], index: 8, kind: output, shape index: {}]
  %s9 = sld [smem:[#allocation0]]
  $region42: #{tpu_custom_call.1} parent=0
    _
  %s11 = ssub.s32 1, %s9
  %s12 = scalar_select 0, %s11, %s9
  %13 = sst [smem:[#allocation2]] %s7
  $region1: #{tpu_custom_call.1} parent=0
    #allocation3 [shape = 'u8[8192]{0}', space=vmem, size = 0x2000, scoped, tag = 'output window, operand 0, single buffered']
    #allocation4 [shape = 's32[1]{0}', space=sflag, size = 0x4, scoped, tag = 'scoped memory for tpu_custom_call.1']
    %14 = vsyncpa [#allocation4], 0
    // Predicated region
    $region2: #{tpu_custom_call.1} parent=1 // pred_check
      _
    $region3: #{tpu_custom_call.1} parent=1 // pred_check_branch
      %16 = sbr.rel (0) target = $region5
    $region4: #{tpu_custom_call.1} parent=1 // pred_region
      _
    $region5: #{tpu_custom_call.1} parent=1 // pred_fallthru
      _
    // Predicated region
    $region6: #{tpu_custom_call.1} parent=1 // pred_check
      _
    $region7: #{tpu_custom_call.1} parent=1 // pred_check_branch
      %18 = sbr.rel (0) target = $region9
    $region8: #{tpu_custom_call.1} parent=1 // pred_region
      _
    $region9: #{tpu_custom_call.1} parent=1 // pred_fallthru
      _
    // Predicated region
    $region10: #{tpu_custom_call.1} parent=1 // pred_check
      _
    $region11: #{tpu_custom_call.1} parent=1 // pred_check_branch
      %20 = sbr.rel (0) target = $region13
    $region12: #{tpu_custom_call.1} parent=1 // pred_region
      _
    $region13: #{tpu_custom_call.1} parent=1 // pred_fallthru
      _
    // Predicated region
    $region14: #{tpu_custom_call.1} parent=1 // pred_check
      _
    $region15: #{tpu_custom_call.1} parent=1 // pred_check_branch
      %22 = sbr.rel (0) target = $region17
    $region16: #{tpu_custom_call.1} parent=1 // pred_region
      _
    $region17: #{tpu_custom_call.1} parent=1 // pred_fallthru
      _
    // Predicated region
    $region18: #{tpu_custom_call.1} parent=1 // pred_check
      _
    $region19: #{tpu_custom_call.1} parent=1 // pred_check_branch
      %24 = sbr.rel (0) target = $region21
    $region20: #{tpu_custom_call.1} parent=1 // pred_region
      _
    $region21: #{tpu_custom_call.1} parent=1 // pred_fallthru
      _
    // Predicated region
    $region22: #{tpu_custom_call.1} parent=1 // pred_check
      _
    $region23: #{tpu_custom_call.1} parent=1 // pred_check_branch
      %26 = sbr.rel (0) target = $region25
    $region24: #{tpu_custom_call.1} parent=1 // pred_region
      _
    $region25: #{tpu_custom_call.1} parent=1 // pred_fallthru
      _
    // Predicated region
    $region26: #{tpu_custom_call.1} parent=1 // pred_check
      _
    $region27: #{tpu_custom_call.1} parent=1 // pred_check_branch
      %28 = sbr.rel (0) target = $region29
    $region28: #{tpu_custom_call.1} parent=1 // pred_region
      _
    $region29: #{tpu_custom_call.1} parent=1 // pred_fallthru
      _
    // Predicated region
    $region30: #{tpu_custom_call.1} parent=1 // pred_check
      _
    $region31: #{tpu_custom_call.1} parent=1 // pred_check_branch
      %30 = sbr.rel (0) target = $region33
    $region32: #{tpu_custom_call.1} parent=1 // pred_region
      _
    $region33: #{tpu_custom_call.1} parent=1 // pred_fallthru
      _
    %v31 = vld [vmem:[%s0] sm:$0xff]
    %v32 = vld [vmem:[%s0 + $0x8] sm:$0xff]
    %v33 = vld [vmem:[%s0 + $0x10] sm:$0xff]
    %v34 = vld [vmem:[%s0 + $0x18] sm:$0xff]
    %v35 = vld [vmem:[%s0 + $0x20] sm:$0xff]
    %v36 = vld [vmem:[%s0 + $0x28] sm:$0xff]
    %v37 = vld [vmem:[%s0 + $0x30] sm:$0xff]
    %v38 = vld [vmem:[%s0 + $0x38] sm:$0xff]
    %v39 = vld [vmem:[%s0 + $0x40] sm:$0xff]
    %v40 = vld [vmem:[%s0 + $0x48] sm:$0xff]
    %v41 = vld [vmem:[%s0 + $0x50] sm:$0xff]
    %v42 = vld [vmem:[%s0 + $0x58] sm:$0xff]
    %v43 = vld [vmem:[%s0 + $0x60] sm:$0xff]
    %v44 = vld [vmem:[%s0 + $0x68] sm:$0xff]
    %v45 = vld [vmem:[%s0 + $0x70] sm:$0xff]
    %v46 = vld [vmem:[%s0 + $0x78] sm:$0xff]
    %v47 = vld [vmem:[%s1] sm:$0xff]
    %v48 = vld [vmem:[%s1 + $0x8] sm:$0xff]
    %v49 = vld [vmem:[%s1 + $0x10] sm:$0xff]
    %v50 = vld [vmem:[%s1 + $0x18] sm:$0xff]
    %v51 = vld [vmem:[%s1 + $0x20] sm:$0xff]
    %v52 = vld [vmem:[%s1 + $0x28] sm:$0xff]
    %v53 = vld [vmem:[%s1 + $0x30] sm:$0xff]
    %v54 = vld [vmem:[%s1 + $0x38] sm:$0xff]
    %v55 = vld [vmem:[%s2] sm:$0xff]
    %v56 = vld [vmem:[%s2 + $0x8] sm:$0xff]
    %v57 = vld [vmem:[%s2 + $0x10] sm:$0xff]
    %v58 = vld [vmem:[%s2 + $0x18] sm:$0xff]
    %v59 = vld [vmem:[%s2 + $0x20] sm:$0xff]
    %v60 = vld [vmem:[%s2 + $0x28] sm:$0xff]
    %v61 = vld [vmem:[%s2 + $0x30] sm:$0xff]
    %v62 = vld [vmem:[%s2 + $0x38] sm:$0xff]
    %64 = vset.pattern.permute.xlu0 0
    %65 = vperm.xlu0 %64, %v55
    %v66 = vpop.permute.xlu0 %65
    %69 = vset.pattern.permute.xlu0 0
    %70 = vperm.xlu0 %69, %v56
    %v71 = vpop.permute.xlu0 %70
    %74 = vset.pattern.permute.xlu0 0
    %75 = vperm.xlu0 %74, %v57
    %v76 = vpop.permute.xlu0 %75
    %79 = vset.pattern.permute.xlu0 0
    %80 = vperm.xlu0 %79, %v58
    %v81 = vpop.permute.xlu0 %80
    %84 = vset.pattern.permute.xlu0 0
    %85 = vperm.xlu0 %84, %v59
    %v86 = vpop.permute.xlu0 %85
    %89 = vset.pattern.permute.xlu0 0
    %90 = vperm.xlu0 %89, %v60
    %v91 = vpop.permute.xlu0 %90
    %94 = vset.pattern.permute.xlu0 0
    %95 = vperm.xlu0 %94, %v61
    %v96 = vpop.permute.xlu0 %95
    %99 = vset.pattern.permute.xlu0 0
    %100 = vperm.xlu0 %99, %v62
    %v101 = vpop.permute.xlu0 %100
    %vm103 = vcmask 261120
    %v105 = vsel %vm103, %v47, 0
    %v108 = vsel %vm103, %v48, 0
    %v111 = vsel %vm103, %v49, 0
    %v114 = vsel %vm103, %v50, 0
    %v117 = vsel %vm103, %v51, 0
    %v120 = vsel %vm103, %v52, 0
    %v123 = vsel %vm103, %v53, 0
    %v126 = vsel %vm103, %v54, 0
    %v129 = vsel %vm103, %v31, 0
    %v132 = vsel %vm103, %v32, 0
    %v135 = vsel %vm103, %v33, 0
    %v138 = vsel %vm103, %v34, 0
    %v141 = vsel %vm103, %v35, 0
    %v144 = vsel %vm103, %v36, 0
    %v147 = vsel %vm103, %v37, 0
    %v150 = vsel %vm103, %v38, 0
    %v153 = vsel %vm103, %v39, 0
    %v156 = vsel %vm103, %v40, 0
    %v159 = vsel %vm103, %v41, 0
    %v162 = vsel %vm103, %v42, 0
    %v165 = vsel %vm103, %v43, 0
    %v168 = vsel %vm103, %v44, 0
    %v171 = vsel %vm103, %v45, 0
    %v174 = vsel %vm103, %v46, 0
    %176 = vmatpush.xpose.msra.mxu0 %v174
    %177 = vmatpush.xpose.msra.mxu0 %v171
    %178 = vmatpush.xpose.msra.mxu0 %v168
    %179 = vmatpush.xpose.msra.mxu0 %v165
    %180 = vmatpush.xpose.msra.mxu0 %v162
    %181 = vmatpush.xpose.msra.mxu0 %v159
    %182 = vmatpush.xpose.msra.mxu0 %v156
    %183 = vmatpush.xpose.msra.mxu0 %v153
    %184 = vmatpush.xpose.msra.mxu0 %v150
    %185 = vmatpush.xpose.msra.mxu0 %v147
    %186 = vmatpush.xpose.msra.mxu0 %v144
    %187 = vmatpush.xpose.msra.mxu0 %v141
    %188 = vmatpush.xpose.msra.mxu0 %v138
    %189 = vmatpush.xpose.msra.mxu0 %v135
    %190 = vmatpush.xpose.msra.mxu0 %v132
    %191 = vmatpush.xpose.msra.mxu0 %v129
    %192 = vmatmul.f32.gmra.mxu0 %v105
    %v193 = vpop.f32.mrf.mxu0
    %v194 = vadd.f32 %v66, %v193
    %195 = vmatmul.f32.gmra.mxu0 %v108
    %v196 = vpop.f32.mrf.mxu0
    %v197 = vadd.f32 %v71, %v196
    %198 = vmatmul.f32.gmra.mxu0 %v111
    %v199 = vpop.f32.mrf.mxu0
    %v200 = vadd.f32 %v76, %v199
    %201 = vmatmul.f32.gmra.mxu0 %v114
    %v202 = vpop.f32.mrf.mxu0
    %v203 = vadd.f32 %v81, %v202
    %204 = vmatmul.f32.gmra.mxu0 %v117
    %v205 = vpop.f32.mrf.mxu0
    %v206 = vadd.f32 %v86, %v205
    %207 = vmatmul.f32.gmra.mxu0 %v120
    %v208 = vpop.f32.mrf.mxu0
    %v209 = vadd.f32 %v91, %v208
    %210 = vmatmul.f32.gmra.mxu0 %v123
    %v211 = vpop.f32.mrf.mxu0
    %v212 = vadd.f32 %v96, %v211
    %213 = vmatmul.f32.gmra.mxu0 %v126
    %v214 = vpop.f32.mrf.mxu0
    %v215 = vadd.f32 %v101, %v214
    %216 = vdwg.mxu0
    %v217 = vmax.f32 %v194, 0.0
    %v218 = vmax.f32 %v197, 0.0
    %v219 = vmax.f32 %v200, 0.0
    %v220 = vmax.f32 %v203, 0.0
    %v221 = vmax.f32 %v206, 0.0
    %v222 = vmax.f32 %v209, 0.0
    %v223 = vmax.f32 %v212, 0.0
    %v224 = vmax.f32 %v215, 0.0
    %v225 = vld [vmem:[%s3] sm:$0xff]
    %v226 = vld [vmem:[%s3 + $0x8] sm:$0xff]
    %v227 = vld [vmem:[%s3 + $0x10] sm:$0xff]
    %v228 = vld [vmem:[%s3 + $0x18] sm:$0xff]
    %v229 = vld [vmem:[%s3 + $0x20] sm:$0xff]
    %v230 = vld [vmem:[%s3 + $0x28] sm:$0xff]
    %v231 = vld [vmem:[%s3 + $0x30] sm:$0xff]
    %v232 = vld [vmem:[%s3 + $0x38] sm:$0xff]
    %v233 = vld [vmem:[%s4] sm:$0xff]
    %v234 = vld [vmem:[%s4 + $0x8] sm:$0xff]
    %v235 = vld [vmem:[%s4 + $0x10] sm:$0xff]
    %v236 = vld [vmem:[%s4 + $0x18] sm:$0xff]
    %v237 = vld [vmem:[%s4 + $0x20] sm:$0xff]
    %v238 = vld [vmem:[%s4 + $0x28] sm:$0xff]
    %v239 = vld [vmem:[%s4 + $0x30] sm:$0xff]
    %v240 = vld [vmem:[%s4 + $0x38] sm:$0xff]
    %242 = vset.pattern.permute.xlu0 0
    %243 = vperm.xlu0 %242, %v233
    %v244 = vpop.permute.xlu0 %243
    %247 = vset.pattern.permute.xlu0 0
    %248 = vperm.xlu0 %247, %v234
    %v249 = vpop.permute.xlu0 %248
    %252 = vset.pattern.permute.xlu0 0
    %253 = vperm.xlu0 %252, %v235
    %v254 = vpop.permute.xlu0 %253
    %257 = vset.pattern.permute.xlu0 0
    %258 = vperm.xlu0 %257, %v236
    %v259 = vpop.permute.xlu0 %258
    %262 = vset.pattern.permute.xlu0 0
    %263 = vperm.xlu0 %262, %v237
    %v264 = vpop.permute.xlu0 %263
    %267 = vset.pattern.permute.xlu0 0
    %268 = vperm.xlu0 %267, %v238
    %v269 = vpop.permute.xlu0 %268
    %272 = vset.pattern.permute.xlu0 0
    %273 = vperm.xlu0 %272, %v239
    %v274 = vpop.permute.xlu0 %273
    %277 = vset.pattern.permute.xlu0 0
    %278 = vperm.xlu0 %277, %v240
    %v279 = vpop.permute.xlu0 %278
    %vm281 = vcmask 523264
    %v283 = vsel %vm281, %v225, 0
    %v286 = vsel %vm281, %v226, 0
    %v289 = vsel %vm281, %v227, 0
    %v292 = vsel %vm281, %v228, 0
    %v295 = vsel %vm281, %v229, 0
    %v298 = vsel %vm281, %v230, 0
    %v301 = vsel %vm281, %v231, 0
    %v304 = vsel %vm281, %v232, 0
    %306 = vmatpush.msra.mxu0 0.0
    %307 = vmatpush.msra.mxu0 0.0
    %308 = vmatpush.msra.mxu0 0.0
    %309 = vmatpush.msra.mxu0 0.0
    %310 = vmatpush.msra.mxu0 0.0
    %311 = vmatpush.msra.mxu0 0.0
    %312 = vmatpush.msra.mxu0 0.0
    %313 = vmatpush.msra.mxu0 0.0
    %314 = vmatpush.msra.mxu0 %v224
    %315 = vmatpush.msra.mxu0 %v223
    %316 = vmatpush.msra.mxu0 %v222
    %317 = vmatpush.msra.mxu0 %v221
    %318 = vmatpush.msra.mxu0 %v220
    %319 = vmatpush.msra.mxu0 %v219
    %320 = vmatpush.msra.mxu0 %v218
    %321 = vmatpush.msra.mxu0 %v217
    %322 = vmatmul.f32.gmra.mxu0 %v283
    %v323 = vpop.f32.mrf.mxu0
    %v324 = vadd.f32 %v244, %v323
    %325 = vmatmul.f32.gmra.mxu0 %v286
    %v326 = vpop.f32.mrf.mxu0
    %v327 = vadd.f32 %v249, %v326
    %328 = vmatmul.f32.gmra.mxu0 %v289
    %v329 = vpop.f32.mrf.mxu0
    %v330 = vadd.f32 %v254, %v329
    %331 = vmatmul.f32.gmra.mxu0 %v292
    %v332 = vpop.f32.mrf.mxu0
    %v333 = vadd.f32 %v259, %v332
    %334 = vmatmul.f32.gmra.mxu0 %v295
    %v335 = vpop.f32.mrf.mxu0
    %v336 = vadd.f32 %v264, %v335
    %337 = vmatmul.f32.gmra.mxu0 %v298
    %v338 = vpop.f32.mrf.mxu0
    %v339 = vadd.f32 %v269, %v338
    %340 = vmatmul.f32.gmra.mxu0 %v301
    %v341 = vpop.f32.mrf.mxu0
    %v342 = vadd.f32 %v274, %v341
    %343 = vmatmul.f32.gmra.mxu0 %v304
    %v344 = vpop.f32.mrf.mxu0
    %v345 = vadd.f32 %v279, %v344
    %346 = vdwg.mxu0
    %v347 = vmax.f32 %v324, 0.0
    %v348 = vmax.f32 %v327, 0.0
    %v349 = vmax.f32 %v330, 0.0
    %v350 = vmax.f32 %v333, 0.0
    %v351 = vmax.f32 %v336, 0.0
    %v352 = vmax.f32 %v339, 0.0
    %v353 = vmax.f32 %v342, 0.0
    %v354 = vmax.f32 %v345, 0.0
    %v355 = vld [vmem:[%s5] sm:$0xff]
    %v356 = vld [vmem:[%s5 + $0x8] sm:$0xff]
    %v357 = vld [vmem:[%s6] sm:$0xff]
    %v358 = vld [vmem:[%s6 + $0x8] sm:$0xff]
    %360 = vset.pattern.permute.xlu0 0
    %361 = vperm.xlu0 %360, %v357
    %v362 = vpop.permute.xlu0 %361
    %365 = vset.pattern.permute.xlu0 0
    %366 = vperm.xlu0 %365, %v358
    %v367 = vpop.permute.xlu0 %366
    %v370 = vsel %vm281, %v355, 0
    %v373 = vsel %vm281, %v356, 0
    %375 = vmatpush.msra.mxu0 0.0
    %376 = vmatpush.msra.mxu0 0.0
    %377 = vmatpush.msra.mxu0 0.0
    %378 = vmatpush.msra.mxu0 0.0
    %379 = vmatpush.msra.mxu0 0.0
    %380 = vmatpush.msra.mxu0 0.0
    %381 = vmatpush.msra.mxu0 0.0
    %382 = vmatpush.msra.mxu0 0.0
    %383 = vmatpush.msra.mxu0 %v354
    %384 = vmatpush.msra.mxu0 %v353
    %385 = vmatpush.msra.mxu0 %v352
    %386 = vmatpush.msra.mxu0 %v351
    %387 = vmatpush.msra.mxu0 %v350
    %388 = vmatpush.msra.mxu0 %v349
    %389 = vmatpush.msra.mxu0 %v348
    %390 = vmatpush.msra.mxu0 %v347
    %391 = vmatmul.f32.gmra.mxu0 %v370
    %v392 = vpop.f32.mrf.mxu0
    %v393 = vadd.f32 %v362, %v392
    %394 = vmatmul.f32.gmra.mxu0 %v373
    %v395 = vpop.f32.mrf.mxu0
    %v396 = vadd.f32 %v367, %v395
    %397 = vdwg.mxu0
    %398 = vst [vmem:[#allocation3] sm:$0xff] %v393
    %399 = vst [vmem:[#allocation3 + $0x8] sm:$0xff] %v396
    // Predicated region
    $region34: #{tpu_custom_call.1} parent=1 // pred_check
      _
    $region35: #{tpu_custom_call.1} parent=1 // pred_check_branch
      %401 = sbr.rel (0) target = $region37
    $region36: #{tpu_custom_call.1} parent=1 // pred_region
      %403 = vsyncadd [#allocation4], 0
      %s404 = sshll.u32 [#allocation3], 4
      %s405 = int_to_ptr.vmem [resolvable:$true] %s404
      %s406 = sshll.u32 %s8, 4
      %s407 = int_to_ptr.hbm [resolvable:$true] %s406
      %412 = dma.vmem_to_hbm [thread:$0]  %s405, 256, %s407, [#allocation4], 128, 128, 8
    $region37: #{tpu_custom_call.1} parent=1 // pred_fallthru
      _
    // Predicated region
    $region38: #{tpu_custom_call.1} parent=1 // pred_check
      _
    $region39: #{tpu_custom_call.1} parent=1 // pred_check_branch
      %414 = sbr.rel (0) target = $region41
    $region40: #{tpu_custom_call.1} parent=1 // pred_region
      %416 = dma.done [#allocation4], 256
    $region41: #{tpu_custom_call.1} parent=1 // pred_fallthru
      _
    %417 = vsyncpa [#allocation4], 1

</llo_original>
